<compile_context>
chip_gen: v6e
topology: v6e:2x2x1
jax: 0.10.0
libtpu: 0.0.40
codegen_flags: <defaults>
</compile_context>

<pallas_src>
import jax
import jax.numpy as jnp
from jax.experimental import pallas as pl
from jax.experimental.pallas import tpu as pltpu


def _fused_head_kernel(x_ref, w6_ref, b6_ref, w7_ref, b7_ref, o_ref, acc_ref):
    """relu(relu(x @ w6 + b6) @ w7 + b7) for one (tm, rep) row slab.

    Grid: (M // tm, K // tk).  Axis 1 walks the fc6 reduction.  The fc6 bias
    is folded into the accumulator init; the fc7 matmul + bias + ReLU run on
    the final K step with the hidden activation held in VMEM only.
    """
    k = pl.program_id(1)

    @pl.when(k == 0)
    def _():
        # Fold fc6 bias into the accumulator init.
        acc_ref[...] = jnp.broadcast_to(
            b6_ref[...].astype(jnp.float32), acc_ref.shape
        )

    acc_ref[...] += jnp.dot(
        x_ref[...], w6_ref[...], preferred_element_type=jnp.float32
    )

    @pl.when(k == pl.num_programs(1) - 1)
    def _():
        h = jnp.maximum(acc_ref[...], 0.0)                       # relu(fc6)
        out = jnp.dot(
            h.astype(w7_ref.dtype), w7_ref[...],
            preferred_element_type=jnp.float32,
        )
        out = out + b7_ref[...].astype(jnp.float32)              # + b7
        o_ref[...] = jnp.maximum(out, 0.0).astype(o_ref.dtype)   # relu(fc7)


def _round_up(x, m):
    return ((x + m - 1) // m) * m


def two_mlp_head_fused(x_flat, w6, b6, w7, b7, *, tm=128, tk=512):
    """y = relu(relu(x_flat @ w6 + b6) @ w7 + b7) in one fused pallas_call.

    x_flat: (M, K)   w6: (K, N)   b6: (N,)   w7: (N, N)   b7: (N,)
    Weights are stored (in, out) = transpose of PyTorch nn.Linear layout.
    """
    M, K = x_flat.shape
    K2, N = w6.shape
    assert K == K2
    assert w7.shape == (N, N) and b6.shape == (N,) and b7.shape == (N,)
    assert N % 128 == 0, "representation_size must be a multiple of 128"

    # Clamp tiles to the (aligned) problem so tiny inputs don't over-pad.
    tm = min(tm, _round_up(M, 8))
    tk = min(tk, _round_up(K, 128))

    Mp = _round_up(M, tm)
    Kp = _round_up(K, tk)

    # Zero-pad: extra K columns contribute 0 to the dot; extra M rows are
    # sliced off the output.  (Replaces the old hard divisibility asserts.)
    if (Mp, Kp) != (M, K):
        x_flat = jnp.pad(x_flat, ((0, Mp - M), (0, Kp - K)))
    if Kp != K:
        w6 = jnp.pad(w6, ((0, Kp - K), (0, 0)))

    b6_2d = b6.reshape(1, N)
    b7_2d = b7.reshape(1, N)

    out = pl.pallas_call(
        _fused_head_kernel,
        out_shape=jax.ShapeDtypeStruct((Mp, N), x_flat.dtype),
        grid_spec=pltpu.PrefetchScalarGridSpec(
            num_scalar_prefetch=0,
            grid=(Mp // tm, Kp // tk),
            in_specs=[
                pl.BlockSpec((tm, tk), lambda i, k: (i, k)),   # x row-slab
                pl.BlockSpec((tk, N), lambda i, k: (k, 0)),    # w6 K-slab, full N
                pl.BlockSpec((1, N), lambda i, k: (0, 0)),     # b6 (resident)
                pl.BlockSpec((N, N), lambda i, k: (0, 0)),     # w7 (resident)
                pl.BlockSpec((1, N), lambda i, k: (0, 0)),     # b7 (resident)
            ],
            out_specs=pl.BlockSpec((tm, N), lambda i, k: (i, 0)),
            scratch_shapes=[pltpu.VMEM((tm, N), jnp.float32)],
        ),
        compiler_params=pltpu.CompilerParams(
            dimension_semantics=("parallel", "arbitrary"),
            vmem_limit_bytes=64 * 1024 * 1024,
        ),
    )(x_flat, w6, b6_2d, w7, b7_2d)

    return out[:M]


@jax.jit
def two_mlp_head(x, w6, b6, w7, b7):
    """x: (B, C, H, W) NCHW -> (B, representation_size)."""
    B = x.shape[0]
    x_flat = x.reshape(B, -1)                       # flatten(start_dim=1)
    return two_mlp_head_fused(x_flat, w6, b6, w7, b7)
    # TODO(synk): for v6e/v7x, cast x/w6/w7 to bfloat16 (keep f32 accumulation)
    # to hit MXU peak and halve weight-streaming bytes; kept f32 here to match
    # the PyTorch reference bit-for-bit within tolerance.


def _reference(x, w6, b6, w7, b7):
    x_flat = x.reshape(x.shape[0], -1)
    h = jnp.maximum(x_flat @ w6 + b6, 0.0)
    return jnp.maximum(h @ w7 + b7, 0.0)


if __name__ == "__main__":
    # Small shapes consistent with the module: ROI features (B, C, H, W),
    # in_channels = C*H*W, representation_size = rep.
    B, C, H, W = 8, 4, 16, 16        # in_channels = 4*16*16 = 1024
    in_channels = C * H * W
    rep = 128

    key = jax.random.PRNGKey(0)
    k_x, k_w6, k_b6, k_w7, k_b7 = jax.random.split(key, 5)

    x = jax.random.normal(k_x, (B, C, H, W), dtype=jnp.float32)

    # Deterministic synthetic params; stored as (in, out) = transpose of
    # PyTorch's nn.Linear weight layout (out, in).
    w6 = jax.random.normal(k_w6, (in_channels, rep), dtype=jnp.float32) * 0.02
    b6 = jax.random.normal(k_b6, (rep,), dtype=jnp.float32) * 0.02
    w7 = jax.random.normal(k_w7, (rep, rep), dtype=jnp.float32) * 0.02
    b7 = jax.random.normal(k_b7, (rep,), dtype=jnp.float32) * 0.02

    out = two_mlp_head(x, w6, b6, w7, b7)
    out = jax.block_until_ready(out)

    ref = _reference(x, w6, b6, w7, b7)
    assert out.shape == (B, rep)
    assert jnp.allclose(out, ref, atol=1e-4, rtol=1e-4), "mismatch vs reference"

    print("KERNEL_OK")
</pallas_src>

<mosaic_0001>
module attributes {stable_mosaic.version = 11 : i64} {
  func.func @_fused_head_kernel(%arg0: i32, %arg1: i32, %arg2: memref<8x512xf32, #tpu.memory_space<vmem>>, %arg3: memref<512x128xf32, #tpu.memory_space<vmem>>, %arg4: memref<1x128xf32, #tpu.memory_space<vmem>>, %arg5: memref<128x128xf32, #tpu.memory_space<vmem>>, %arg6: memref<1x128xf32, #tpu.memory_space<vmem>>, %arg7: memref<8x128xf32, #tpu.memory_space<vmem>>, %arg8: memref<8x128xf32, #tpu.memory_space<vmem>>) attributes {dimension_semantics = [#tpu.dimension_semantics<parallel>, #tpu.dimension_semantics<arbitrary>], iteration_bounds = array<i64: 1, 2>, scalar_prefetch = 0 : i64, scratch_operands = 1 : i64, tpu.core_type = #tpu.core_type<tc>, window_params = [{transform_indices = @transform_0, window_bounds = array<i64: 8, 512>}, {transform_indices = @transform_1, window_bounds = array<i64: 512, 128>}, {pipeline_mode = #tpu.pipeline_mode<synchronous>, transform_indices = @transform_2, window_bounds = array<i64: 1, 128>}, {pipeline_mode = #tpu.pipeline_mode<synchronous>, transform_indices = @transform_3, window_bounds = array<i64: 128, 128>}, {pipeline_mode = #tpu.pipeline_mode<synchronous>, transform_indices = @transform_4, window_bounds = array<i64: 1, 128>}, {transform_indices = @transform_5, window_bounds = array<i64: 8, 128>}]} {
    %c0_i32 = arith.constant 0 : i32
    %0 = arith.cmpi eq, %arg1, %c0_i32 : i32
    %1 = arith.extui %0 : i1 to i32
    %c0_i32_0 = arith.constant 0 : i32
    %2 = arith.cmpi ne, %1, %c0_i32_0 : i32
    scf.if %2 {
      %c0_9 = arith.constant 0 : index
      %c0_10 = arith.constant 0 : index
      %12 = vector.load %arg4[%c0_9, %c0_10] : memref<1x128xf32, #tpu.memory_space<vmem>>, vector<1x128xf32>
      %13 = vector.shape_cast %12 : vector<1x128xf32> to vector<1x128xf32>
      %14 = vector.broadcast %13 : vector<1x128xf32> to vector<8x128xf32>
      %c0_11 = arith.constant 0 : index
      %c0_12 = arith.constant 0 : index
      %15 = vector.load %arg8[%c0_11, %c0_12] : memref<8x128xf32, #tpu.memory_space<vmem>>, vector<8x128xf32>
      tpu.vector_store %arg8[%c0_11, %c0_12], %14 {strides = array<i32>} : memref<8x128xf32, #tpu.memory_space<vmem>>, vector<8x128xf32>,
    } else {
    }
    %c0 = arith.constant 0 : index
    %c0_1 = arith.constant 0 : index
    %3 = vector.load %arg8[%c0, %c0_1] : memref<8x128xf32, #tpu.memory_space<vmem>>, vector<8x128xf32>
    %c0_2 = arith.constant 0 : index
    %c0_3 = arith.constant 0 : index
    %4 = vector.load %arg2[%c0_2, %c0_3] : memref<8x512xf32, #tpu.memory_space<vmem>>, vector<8x512xf32>
    %c0_4 = arith.constant 0 : index
    %c0_5 = arith.constant 0 : index
    %5 = vector.load %arg3[%c0_4, %c0_5] : memref<512x128xf32, #tpu.memory_space<vmem>>, vector<512x128xf32>
    %cst = arith.constant dense<0.000000e+00> : vector<8x128xf32>
    %6 = tpu.matmul %4, %5, %cst {dimension_numbers = #tpu.dot_dimension_numbers<[1], [0], [0], [1], [0, 0, 1, 1], [], []>} : vector<8x512xf32>, vector<512x128xf32>, vector<8x128xf32> -> vector<8x128xf32>
    %7 = arith.addf %3, %6 : vector<8x128xf32>
    %c0_6 = arith.constant 0 : index
    %c0_7 = arith.constant 0 : index
    %8 = vector.load %arg8[%c0_6, %c0_7] : memref<8x128xf32, #tpu.memory_space<vmem>>, vector<8x128xf32>
    tpu.vector_store %arg8[%c0_6, %c0_7], %7 {strides = array<i32>} : memref<8x128xf32, #tpu.memory_space<vmem>>, vector<8x128xf32>,
    %c1_i32 = arith.constant 1 : i32
    %9 = arith.cmpi eq, %arg1, %c1_i32 : i32
    %10 = arith.extui %9 : i1 to i32
    %c0_i32_8 = arith.constant 0 : i32
    %11 = arith.cmpi ne, %10, %c0_i32_8 : i32
    scf.if %11 {
      %c0_9 = arith.constant 0 : index
      %c0_10 = arith.constant 0 : index
      %12 = vector.load %arg8[%c0_9, %c0_10] : memref<8x128xf32, #tpu.memory_space<vmem>>, vector<8x128xf32>
      %cst_11 = arith.constant 0.000000e+00 : f32
      %13 = vector.broadcast %cst_11 : f32 to vector<8x128xf32>
      %14 = arith.maximumf %12, %13 : vector<8x128xf32>
      %c0_12 = arith.constant 0 : index
      %c0_13 = arith.constant 0 : index
      %15 = vector.load %arg5[%c0_12, %c0_13] : memref<128x128xf32, #tpu.memory_space<vmem>>, vector<128x128xf32>
      %cst_14 = arith.constant dense<0.000000e+00> : vector<8x128xf32>
      %16 = tpu.matmul %14, %15, %cst_14 {dimension_numbers = #tpu.dot_dimension_numbers<[1], [0], [0], [1], [0, 0, 1, 1], [], []>} : vector<8x128xf32>, vector<128x128xf32>, vector<8x128xf32> -> vector<8x128xf32>
      %c0_15 = arith.constant 0 : index
      %c0_16 = arith.constant 0 : index
      %17 = vector.load %arg6[%c0_15, %c0_16] : memref<1x128xf32, #tpu.memory_space<vmem>>, vector<1x128xf32>
      %18 = vector.broadcast %17 : vector<1x128xf32> to vector<8x128xf32>
      %19 = arith.addf %16, %18 : vector<8x128xf32>
      %cst_17 = arith.constant 0.000000e+00 : f32
      %20 = vector.broadcast %cst_17 : f32 to vector<8x128xf32>
      %21 = arith.maximumf %19, %20 : vector<8x128xf32>
      %c0_18 = arith.constant 0 : index
      %c0_19 = arith.constant 0 : index
      %22 = vector.load %arg7[%c0_18, %c0_19] : memref<8x128xf32, #tpu.memory_space<vmem>>, vector<8x128xf32>
      tpu.vector_store %arg7[%c0_18, %c0_19], %21 {strides = array<i32>} : memref<8x128xf32, #tpu.memory_space<vmem>>, vector<8x128xf32>,
    } else {
    }
    return
  }
  func.func @transform_0(%arg0: i32, %arg1: i32) -> (i32, i32) {
    %c0_i32 = arith.constant 0 : i32
    return %arg0, %arg1 : i32, i32
  }
  func.func @transform_1(%arg0: i32, %arg1: i32) -> (i32, i32) {
    %c0_i32 = arith.constant 0 : i32
    %c0_i32_0 = arith.constant 0 : i32
    return %arg1, %c0_i32 : i32, i32
  }
  func.func @transform_2(%arg0: i32, %arg1: i32) -> (i32, i32) {
    %c0_i32 = arith.constant 0 : i32
    %c0_i32_0 = arith.constant 0 : i32
    %c0_i32_1 = arith.constant 0 : i32
    return %c0_i32, %c0_i32_0 : i32, i32
  }
  func.func @transform_3(%arg0: i32, %arg1: i32) -> (i32, i32) {
    %c0_i32 = arith.constant 0 : i32
    %c0_i32_0 = arith.constant 0 : i32
    %c0_i32_1 = arith.constant 0 : i32
    return %c0_i32, %c0_i32_0 : i32, i32
  }
  func.func @transform_4(%arg0: i32, %arg1: i32) -> (i32, i32) {
    %c0_i32 = arith.constant 0 : i32
    %c0_i32_0 = arith.constant 0 : i32
    %c0_i32_1 = arith.constant 0 : i32
    return %c0_i32, %c0_i32_0 : i32, i32
  }
  func.func @transform_5(%arg0: i32, %arg1: i32) -> (i32, i32) {
    %c0_i32 = arith.constant 0 : i32
    %c0_i32_0 = arith.constant 0 : i32
    return %arg0, %c0_i32 : i32, i32
  }
}

</mosaic_0001>

<llo_original>
// kernel: two_mlp_head.1
$region0: #{two_mlp_head.1}
  #allocation0 [shape = 'u32[]', space=smem, size = 0x4, offset = 0x4, fixed_abs, tag = 'smem constant byte address 0x4 - core index']
  #allocation1 [shape = 'u32[144,128]{1,0:T(1,128)}', space=vmem, size = 0x12000, scoped, tag = 'internal scratch']
  #allocation2 [shape = 'f32[8,128]{1,0:T(8,128)}', space=vmem, size = 0x1000, scoped, tag = 'scratch operand']
  %s0 = inlined_call_operand.vmem [shape: f32[8,1024], index: 0, kind: input, shape index: {}]
  %s1 = inlined_call_operand.hbm [shape: f32[1024,128], index: 1, kind: input, shape index: {}]
  %s2 = inlined_call_operand.vmem [shape: f32[1,128], index: 2, kind: input, shape index: {}]
  %s3 = inlined_call_operand.vmem [shape: f32[128,128], index: 3, kind: input, shape index: {}]
  %s4 = inlined_call_operand.vmem [shape: f32[1,128], index: 4, kind: input, shape index: {}]
  %s5 = inlined_call_operand.hbm [shape: f32[8,128], index: 5, kind: output, shape index: {}]
  %s6 = sld [smem:[#allocation0]]
  $region65: #{two_mlp_head.1} parent=0
    _
  %s8 = ssub.s32 1, %s6
  %s9 = scalar_select 0, %s8, %s6
  $region1: #{two_mlp_head.1} parent=0
    #allocation3 [shape = 'u8[524288]{0}', space=vmem, size = 0x80000, scoped, tag = 'input window, operand 1']
    #allocation4 [shape = 's32[2]{0}', space=sflag, size = 0x8, scoped, tag = 'scoped memory for two_mlp_head.1']
    #allocation5 [shape = 's32[2]{0}', space=sflag, size = 0x8, scoped, tag = 'scoped memory for two_mlp_head.1']
    #allocation6 [shape = 'u8[4096]{0}', space=vmem, size = 0x1000, scoped, tag = 'output window, operand 0, single buffered']
    %10 = vsyncpa [#allocation4], 0
    %s11 = scalar_lea.sflag [#allocation4], 1
    %12 = vsyncpa %s11, 0
    %13 = vsyncpa [#allocation5], 0
    loop: start=0, step=1, limit=4
    $region2: #{two_mlp_head.1} parent=1 // loop_pre_header
      _
    $region3: #{two_mlp_head.1} parent=1 // loop_header
      %s15 = sphi 0, %s19
      %p16 = scmp.ge.s32.totalorder %s15, 4
      %s22 = sphi 0, %s34
      %s23 = sphi 0, %s30
      %s24 = sphi 0, %s22
      %s25 = sphi 0, %s23
      %s26 = sphi 0, %s24
      %s27 = sphi 0, %s25
      %s39 = sphi 0, %s41
      %s42 = sphi 0, %s39
      %s43 = sphi 0, %s42
      %s59 = sphi 0, %s43
      %s65 = sphi 0, %s67
      %s68 = sphi 0, %s65
      %s69 = sphi 0, %s68
      %s85 = sphi 0, %s69
      %s89 = sphi 0, %s89
      %s91 = sphi 0, %s89
      %s92 = sphi 0, %s91
      %s106 = sphi 0, %s92
      %s110 = sphi 0, %s110
      %s112 = sphi 0, %s110
      %s113 = sphi 0, %s112
      %s127 = sphi 0, %s113
      %s131 = sphi 0, %s131
      %s133 = sphi 0, %s131
      %s134 = sphi 0, %s133
      %s148 = sphi 0, %s134
      %s154 = sphi 0, %s156
      %s157 = sphi 0, %s154
      %s158 = sphi 0, %s157
      %s174 = sphi 0, %s158
    $region4: #{two_mlp_head.1} parent=1 // loop_header_branch
      %18 = sbr.rel (%p16) target = $region8
    $region5: #{two_mlp_head.1} parent=1 // loop_body
      %s20 = ssub.s32 %s15, 1
      %s21 = ssub.s32 %s15, 2
      %s28 = sadd.s32 1, %s23
      %p29 = scmp.ge.s32.totalorder %s28, 2
      %s30 = scalar_select %p29, 0, %s28
      %s31 = sadd.s32 1, %s22
      %s32 = scalar_select %p29, %s31, %s22
      %p33 = scmp.ge.s32.totalorder %s32, 1
      %s34 = scalar_select %p33, 0, %s32
      %s35 = ssub.s32 %s22, %s34
      %s36 = ssub.s32 %s23, %s30
      %s37 = sor.u32 %s35, %s36
      %p38 = scmp.eq.s32.totalorder %s37, 0
      %s40 = sadd.s32 %s39, 1
      %s41 = scalar_select %p38, %s39, %s40
      %p44 = pneg %p38
      %p45 = scmp.eq.s32.totalorder %s15, 1
      %p46 = por %p44, %p45
      %p47 = scmp.ne.s32.totalorder %s39, %s42
      %p48 = scmp.eq.s32.totalorder %s15, 0
      %p49 = por %p47, %p48
      %p50 = scmp.ne.s32.totalorder %s39, %s42
      %p51 = scmp.eq.s32.totalorder %s20, 1
      %p52 = por %p50, %p51
      %p53 = scmp.ne.s32.totalorder %s42, %s43
      %p54 = scmp.eq.s32.totalorder %s20, 0
      %p55 = por %p53, %p54
      %p56 = scmp.ne.s32.totalorder %s42, %s43
      %p57 = scmp.eq.s32.totalorder %s21, 1
      %p58 = por %p56, %p57
      %p60 = scmp.ne.s32.totalorder %s43, %s59
      %p61 = scmp.eq.s32.totalorder %s21, 0
      %p62 = por %p60, %p61
      %s63 = ssub.s32 %s23, %s30
      %p64 = scmp.eq.s32.totalorder %s63, 0
      %s66 = sadd.s32 %s65, 1
      %s67 = scalar_select %p64, %s65, %s66
      %p70 = pneg %p64
      %p71 = scmp.eq.s32.totalorder %s15, 1
      %p72 = por %p70, %p71
      %p73 = scmp.ne.s32.totalorder %s65, %s68
      %p74 = scmp.eq.s32.totalorder %s15, 0
      %p75 = por %p73, %p74
      %p76 = scmp.ne.s32.totalorder %s65, %s68
      %p77 = scmp.eq.s32.totalorder %s20, 1
      %p78 = por %p76, %p77
      %p79 = scmp.ne.s32.totalorder %s68, %s69
      %p80 = scmp.eq.s32.totalorder %s20, 0
      %p81 = por %p79, %p80
      %p82 = scmp.ne.s32.totalorder %s68, %s69
      %p83 = scmp.eq.s32.totalorder %s21, 1
      %p84 = por %p82, %p83
      %p86 = scmp.ne.s32.totalorder %s69, %s85
      %p87 = scmp.eq.s32.totalorder %s21, 0
      %p88 = por %p86, %p87
      %s90 = sadd.s32 %s89, 1
      %p93 = scmp.eq.s32.totalorder %s15, 1
      %p94 = scmp.ne.s32.totalorder %s89, %s91
      %p95 = scmp.eq.s32.totalorder %s15, 0
      %p96 = por %p94, %p95
      %p97 = scmp.ne.s32.totalorder %s89, %s91
      %p98 = scmp.eq.s32.totalorder %s20, 1
      %p99 = por %p97, %p98
      %p100 = scmp.ne.s32.totalorder %s91, %s92
      %p101 = scmp.eq.s32.totalorder %s20, 0
      %p102 = por %p100, %p101
      %p103 = scmp.ne.s32.totalorder %s91, %s92
      %p104 = scmp.eq.s32.totalorder %s21, 1
      %p105 = por %p103, %p104
      %p107 = scmp.ne.s32.totalorder %s92, %s106
      %p108 = scmp.eq.s32.totalorder %s21, 0
      %p109 = por %p107, %p108
      %s111 = sadd.s32 %s110, 1
      %p114 = scmp.eq.s32.totalorder %s15, 1
      %p115 = scmp.ne.s32.totalorder %s110, %s112
      %p116 = scmp.eq.s32.totalorder %s15, 0
      %p117 = por %p115, %p116
      %p118 = scmp.ne.s32.totalorder %s110, %s112
      %p119 = scmp.eq.s32.totalorder %s20, 1
      %p120 = por %p118, %p119
      %p121 = scmp.ne.s32.totalorder %s112, %s113
      %p122 = scmp.eq.s32.totalorder %s20, 0
      %p123 = por %p121, %p122
      %p124 = scmp.ne.s32.totalorder %s112, %s113
      %p125 = scmp.eq.s32.totalorder %s21, 1
      %p126 = por %p124, %p125
      %p128 = scmp.ne.s32.totalorder %s113, %s127
      %p129 = scmp.eq.s32.totalorder %s21, 0
      %p130 = por %p128, %p129
      %s132 = sadd.s32 %s131, 1
      %p135 = scmp.eq.s32.totalorder %s15, 1
      %p136 = scmp.ne.s32.totalorder %s131, %s133
      %p137 = scmp.eq.s32.totalorder %s15, 0
      %p138 = por %p136, %p137
      %p139 = scmp.ne.s32.totalorder %s131, %s133
      %p140 = scmp.eq.s32.totalorder %s20, 1
      %p141 = por %p139, %p140
      %p142 = scmp.ne.s32.totalorder %s133, %s134
      %p143 = scmp.eq.s32.totalorder %s20, 0
      %p144 = por %p142, %p143
      %p145 = scmp.ne.s32.totalorder %s133, %s134
      %p146 = scmp.eq.s32.totalorder %s21, 1
      %p147 = por %p145, %p146
      %p149 = scmp.ne.s32.totalorder %s134, %s148
      %p150 = scmp.eq.s32.totalorder %s21, 0
      %p151 = por %p149, %p150
      %s152 = ssub.s32 %s22, %s34
      %p153 = scmp.eq.s32.totalorder %s152, 0
      %s155 = sadd.s32 %s154, 1
      %s156 = scalar_select %p153, %s154, %s155
      %p159 = pneg %p153
      %p160 = scmp.eq.s32.totalorder %s15, 1
      %p161 = por %p159, %p160
      %p162 = scmp.ne.s32.totalorder %s154, %s157
      %p163 = scmp.eq.s32.totalorder %s15, 0
      %p164 = por %p162, %p163
      %p165 = scmp.ne.s32.totalorder %s154, %s157
      %p166 = scmp.eq.s32.totalorder %s20, 1
      %p167 = por %p165, %p166
      %p168 = scmp.ne.s32.totalorder %s157, %s158
      %p169 = scmp.eq.s32.totalorder %s20, 0
      %p170 = por %p168, %p169
      %p171 = scmp.ne.s32.totalorder %s157, %s158
      %p172 = scmp.eq.s32.totalorder %s21, 1
      %p173 = por %p171, %p172
      %p175 = scmp.ne.s32.totalorder %s158, %s174
      %p176 = scmp.eq.s32.totalorder %s21, 0
      %p177 = por %p175, %p176
      %p178 = scmp.le.s32.totalorder 1, %s15
      %p179 = scmp.lt.s32.totalorder %s15, 3
      %p180 = pnand %p178, %p179
      %p181 = pneg %p180
      // Predicated region
      $region9: #{two_mlp_head.1} parent=5 // pred_check
        _
      $region10: #{two_mlp_head.1} parent=5 // pred_check_branch
        %183 = sbr.rel (%p180) target = $region12
      $region11: #{two_mlp_head.1} parent=5 // pred_region
        %s184 = ssub.s32 %s15, 1
        // Predicated region
        $region13: #{two_mlp_head.1} parent=11 // pred_check
          %p185 = pneg %p102
        $region14: #{two_mlp_head.1} parent=11 // pred_check_branch
          %187 = sbr.rel (%p185) target = $region16
        $region15: #{two_mlp_head.1} parent=11 // pred_region
          _
        $region16: #{two_mlp_head.1} parent=11 // pred_fallthru
          _
        // Predicated region
        $region17: #{two_mlp_head.1} parent=11 // pred_check
          %p188 = pneg %p123
        $region18: #{two_mlp_head.1} parent=11 // pred_check_branch
          %190 = sbr.rel (%p188) target = $region20
        $region19: #{two_mlp_head.1} parent=11 // pred_region
          _
        $region20: #{two_mlp_head.1} parent=11 // pred_fallthru
          _
        // Predicated region
        $region21: #{two_mlp_head.1} parent=11 // pred_check
          %p191 = pneg %p144
        $region22: #{two_mlp_head.1} parent=11 // pred_check_branch
          %193 = sbr.rel (%p191) target = $region24
        $region23: #{two_mlp_head.1} parent=11 // pred_region
          _
        $region24: #{two_mlp_head.1} parent=11 // pred_fallthru
          _
      $region12: #{two_mlp_head.1} parent=5 // pred_fallthru
        _
      %p194 = scmp.lt.s32.totalorder %s15, 2
      // Predicated region
      $region25: #{two_mlp_head.1} parent=5 // pred_check
        %p195 = pneg %p194
      $region26: #{two_mlp_head.1} parent=5 // pred_check_branch
        %197 = sbr.rel (%p195) target = $region28
      $region27: #{two_mlp_head.1} parent=5 // pred_region
        // Predicated region
        $region29: #{two_mlp_head.1} parent=27 // pred_check
          %p198 = pneg %p49
        $region30: #{two_mlp_head.1} parent=27 // pred_check_branch
          %200 = sbr.rel (%p198) target = $region32
        $region31: #{two_mlp_head.1} parent=27 // pred_region
          %s201 = smul.u32 4, %s23
          %p202 = scmp.lt.s32.totalorder %s22, 0
          %s203 = scalar_select %p202, %s22, 0
          %p204 = scmp.lt.s32.totalorder %s201, 7
          %s205 = scalar_select %p204, %s201, 7
          %s206 = smul.addr %s203, 8
          %s207 = sadd.s32 %s205, %s206
          %s208 = smul.addr %s207, 8
          %s209 = scalar_lea.vmem %s0, %s208
          %s210 = smul.u32 4, %s23
        $region32: #{two_mlp_head.1} parent=27 // pred_fallthru
          _
        // Predicated region
        $region33: #{two_mlp_head.1} parent=27 // pred_check
          %p211 = pneg %p75
        $region34: #{two_mlp_head.1} parent=27 // pred_check_branch
          %213 = sbr.rel (%p211) target = $region36
        $region35: #{two_mlp_head.1} parent=27 // pred_region
          %s214 = sand.u32 %s65, 1
          %s215 = scalar_lea.sflag [#allocation4], %s214
          %s216 = sand.u32 %s65, 1
          %s217 = smul.addr %s216, 512
          %s218 = scalar_lea.vmem [#allocation3], %s217
          %s219 = smul.u32 64, %s23
          %s221 = ssub.s32 8192, 8192
          %222 = vsyncadd %s215, %s221
          %s223 = smul.addr %s219, 128
          %s224 = scalar_lea.hbm %s1, %s223
          %s225 = sshll.u32 %s218, 4
          %s226 = int_to_ptr.vmem [resolvable:$true] %s225
          %231 = dma.hbm_to_vmem [thread:$0]  %s224, 8192, %s226, %s215, 128, 128, 8
        $region36: #{two_mlp_head.1} parent=27 // pred_fallthru
          _
      $region28: #{two_mlp_head.1} parent=5 // pred_fallthru
        _
      %p232 = scmp.le.s32.totalorder 1, %s15
      %p233 = scmp.lt.s32.totalorder %s15, 3
      %p234 = pnand %p232, %p233
      %p235 = pneg %p234
      // Predicated region
      $region37: #{two_mlp_head.1} parent=5 // pred_check
        _
      $region38: #{two_mlp_head.1} parent=5 // pred_check_branch
        %237 = sbr.rel (%p234) target = $region40
      $region39: #{two_mlp_head.1} parent=5 // pred_region
        %s238 = ssub.s32 %s15, 1
        %s239 = sand.u32 %s68, 1
        %s240 = scalar_lea.sflag [#allocation4], %s239
        %s241 = sand.u32 %s68, 1
        %s242 = smul.addr %s241, 512
        %s243 = scalar_lea.vmem [#allocation3], %s242
        // Predicated region
        $region41: #{two_mlp_head.1} parent=39 // pred_check
          %p244 = pneg %p81
        $region42: #{two_mlp_head.1} parent=39 // pred_check_branch
          %246 = sbr.rel (%p244) target = $region44
        $region43: #{two_mlp_head.1} parent=39 // pred_region
          %247 = dma.done %s240, 8192
        $region44: #{two_mlp_head.1} parent=39 // pred_fallthru
          _
        %s248 = smul.u32 4, %s25
        %p249 = scmp.lt.s32.totalorder %s24, 0
        %s250 = scalar_select %p249, %s24, 0
        %p251 = scmp.lt.s32.totalorder %s248, 7
        %s252 = scalar_select %p251, %s248, 7
        %s253 = smul.addr %s250, 8
        %s254 = sadd.s32 %s252, %s253
        %s255 = smul.addr %s254, 8
        %s256 = scalar_lea.vmem %s0, %s255
        %p257 = pneg %p55
        %p258 = pneg %p52
        %s259 = sand.u32 %s68, 1
        %s260 = scalar_lea.sflag [#allocation4], %s259
        %s261 = sand.u32 %s68, 1
        %s262 = smul.addr %s261, 512
        %s263 = scalar_lea.vmem [#allocation3], %s262
        %p264 = pneg %p81
        %p265 = pneg %p78
        %p266 = pneg %p102
        %p267 = pneg %p99
        %p268 = pneg %p123
        %p269 = pneg %p120
        %p270 = pneg %p144
        %p271 = pneg %p141
        %p272 = pneg %p170
        %p273 = pneg %p167
        %s274 = smul.u32 4, %s25
        %p275 = scmp.lt.s32.totalorder %s24, 0
        %s276 = scalar_select %p275, %s24, 0
        %p277 = scmp.lt.s32.totalorder %s274, 7
        %s278 = scalar_select %p277, %s274, 7
        %s279 = smul.addr %s276, 8
        %s280 = sadd.s32 %s278, %s279
        %s281 = smul.addr %s280, 8
        %s282 = scalar_lea.vmem %s0, %s281
        %s283 = smul.u32 4, %s25
        %s284 = smul.u32 64, %s25
        %p285 = scmp.eq.s32.totalorder %s25, 0
        // Predicated region
        $region45: #{two_mlp_head.1} parent=39 // pred_check
          %p286 = pneg %p285
        $region46: #{two_mlp_head.1} parent=39 // pred_check_branch
          %288 = sbr.rel (%p286) target = $region48
        $region47: #{two_mlp_head.1} parent=39 // pred_region
          %v289 = vld [vmem:[%s2] sm:$0x1]
          %v291 = vlaneseq
          %v292 = vshrl.u32 %v291, 7
          %v293 = vsub.s32 0, %v292
          %v294 = vrot.slane %v289, %v293
          %296 = vst [vmem:[#allocation2] sm:$0xff] %v294
        $region48: #{two_mlp_head.1} parent=39 // pred_fallthru
          _
        %v297 = vld [vmem:[#allocation2] sm:$0xff]
        %v298 = vld [vmem:[%s282] sm:$0xff]
        %v299 = vld [vmem:[%s282 + $0x8] sm:$0xff]
        %v300 = vld [vmem:[%s282 + $0x10] sm:$0xff]
        %v301 = vld [vmem:[%s282 + $0x18] sm:$0xff]
        %v302 = vld [vmem:[%s243] sm:$0xff]
        %v303 = vld [vmem:[%s243 + $0x8] sm:$0xff]
        %v304 = vld [vmem:[%s243 + $0x10] sm:$0xff]
        %v305 = vld [vmem:[%s243 + $0x18] sm:$0xff]
        %v306 = vld [vmem:[%s243 + $0x20] sm:$0xff]
        %v307 = vld [vmem:[%s243 + $0x28] sm:$0xff]
        %v308 = vld [vmem:[%s243 + $0x30] sm:$0xff]
        %v309 = vld [vmem:[%s243 + $0x38] sm:$0xff]
        %v310 = vld [vmem:[%s243 + $0x40] sm:$0xff]
        %v311 = vld [vmem:[%s243 + $0x48] sm:$0xff]
        %v312 = vld [vmem:[%s243 + $0x50] sm:$0xff]
        %v313 = vld [vmem:[%s243 + $0x58] sm:$0xff]
        %v314 = vld [vmem:[%s243 + $0x60] sm:$0xff]
        %v315 = vld [vmem:[%s243 + $0x68] sm:$0xff]
        %v316 = vld [vmem:[%s243 + $0x70] sm:$0xff]
        %v317 = vld [vmem:[%s243 + $0x78] sm:$0xff]
        %v318 = vld [vmem:[%s243 + $0x80] sm:$0xff]
        %v319 = vld [vmem:[%s243 + $0x88] sm:$0xff]
        %v320 = vld [vmem:[%s243 + $0x90] sm:$0xff]
        %v321 = vld [vmem:[%s243 + $0x98] sm:$0xff]
        %v322 = vld [vmem:[%s243 + $0xa0] sm:$0xff]
        %v323 = vld [vmem:[%s243 + $0xa8] sm:$0xff]
        %v324 = vld [vmem:[%s243 + $0xb0] sm:$0xff]
        %v325 = vld [vmem:[%s243 + $0xb8] sm:$0xff]
        %v326 = vld [vmem:[%s243 + $0xc0] sm:$0xff]
        %v327 = vld [vmem:[%s243 + $0xc8] sm:$0xff]
        %v328 = vld [vmem:[%s243 + $0xd0] sm:$0xff]
        %v329 = vld [vmem:[%s243 + $0xd8] sm:$0xff]
        %v330 = vld [vmem:[%s243 + $0xe0] sm:$0xff]
        %v331 = vld [vmem:[%s243 + $0xe8] sm:$0xff]
        %v332 = vld [vmem:[%s243 + $0xf0] sm:$0xff]
        %v333 = vld [vmem:[%s243 + $0xf8] sm:$0xff]
        %v334 = vld [vmem:[%s243 + $0x100] sm:$0xff]
        %v335 = vld [vmem:[%s243 + $0x108] sm:$0xff]
        %v336 = vld [vmem:[%s243 + $0x110] sm:$0xff]
        %v337 = vld [vmem:[%s243 + $0x118] sm:$0xff]
        %v338 = vld [vmem:[%s243 + $0x120] sm:$0xff]
        %v339 = vld [vmem:[%s243 + $0x128] sm:$0xff]
        %v340 = vld [vmem:[%s243 + $0x130] sm:$0xff]
        %v341 = vld [vmem:[%s243 + $0x138] sm:$0xff]
        %v342 = vld [vmem:[%s243 + $0x140] sm:$0xff]
        %v343 = vld [vmem:[%s243 + $0x148] sm:$0xff]
        %v344 = vld [vmem:[%s243 + $0x150] sm:$0xff]
        %v345 = vld [vmem:[%s243 + $0x158] sm:$0xff]
        %v346 = vld [vmem:[%s243 + $0x160] sm:$0xff]
        %v347 = vld [vmem:[%s243 + $0x168] sm:$0xff]
        %v348 = vld [vmem:[%s243 + $0x170] sm:$0xff]
        %v349 = vld [vmem:[%s243 + $0x178] sm:$0xff]
        %v350 = vld [vmem:[%s243 + $0x180] sm:$0xff]
        %v351 = vld [vmem:[%s243 + $0x188] sm:$0xff]
        %v352 = vld [vmem:[%s243 + $0x190] sm:$0xff]
        %v353 = vld [vmem:[%s243 + $0x198] sm:$0xff]
        %v354 = vld [vmem:[%s243 + $0x1a0] sm:$0xff]
        %v355 = vld [vmem:[%s243 + $0x1a8] sm:$0xff]
        %v356 = vld [vmem:[%s243 + $0x1b0] sm:$0xff]
        %v357 = vld [vmem:[%s243 + $0x1b8] sm:$0xff]
        %v358 = vld [vmem:[%s243 + $0x1c0] sm:$0xff]
        %v359 = vld [vmem:[%s243 + $0x1c8] sm:$0xff]
        %v360 = vld [vmem:[%s243 + $0x1d0] sm:$0xff]
        %v361 = vld [vmem:[%s243 + $0x1d8] sm:$0xff]
        %v362 = vld [vmem:[%s243 + $0x1e0] sm:$0xff]
        %v363 = vld [vmem:[%s243 + $0x1e8] sm:$0xff]
        %v364 = vld [vmem:[%s243 + $0x1f0] sm:$0xff]
        %v365 = vld [vmem:[%s243 + $0x1f8] sm:$0xff]
        %366 = vmatprep.subr.mxu0 0.0
        %367 = vmatpush1.msra.mxu0 %v317
        %368 = vmatprep.subr.mxu0 0.0
        %369 = vmatpush1.msra.mxu0 %v316
        %370 = vmatprep.subr.mxu0 0.0
        %371 = vmatpush1.msra.mxu0 %v315
        %372 = vmatprep.subr.mxu0 0.0
        %373 = vmatpush1.msra.mxu0 %v314
        %374 = vmatprep.subr.mxu0 0.0
        %375 = vmatpush1.msra.mxu0 %v313
        %376 = vmatprep.subr.mxu0 0.0
        %377 = vmatpush1.msra.mxu0 %v312
        %378 = vmatprep.subr.mxu0 0.0
        %379 = vmatpush1.msra.mxu0 %v311
        %380 = vmatprep.subr.mxu0 0.0
        %381 = vmatpush1.msra.mxu0 %v310
        %382 = vmatprep.subr.mxu0 0.0
        %383 = vmatpush1.msra.mxu0 %v309
        %384 = vmatprep.subr.mxu0 0.0
        %385 = vmatpush1.msra.mxu0 %v308
        %386 = vmatprep.subr.mxu0 0.0
        %387 = vmatpush1.msra.mxu0 %v307
        %388 = vmatprep.subr.mxu0 0.0
        %389 = vmatpush1.msra.mxu0 %v306
        %390 = vmatprep.subr.mxu0 0.0
        %391 = vmatpush1.msra.mxu0 %v305
        %392 = vmatprep.subr.mxu0 0.0
        %393 = vmatpush1.msra.mxu0 %v304
        %394 = vmatprep.subr.mxu0 0.0
        %395 = vmatpush1.msra.mxu0 %v303
        %396 = vmatprep.subr.mxu0 0.0
        %397 = vmatpush1.msra.mxu0 %v302
        %398 = vmatprep.subr.mxu0 0.0
        %399 = vmatpush2.msra.mxu0 %v333
        %400 = vmatprep.subr.mxu0 0.0
        %401 = vmatpush2.msra.mxu0 %v332
        %402 = vmatprep.subr.mxu0 0.0
        %403 = vmatpush2.msra.mxu0 %v331
        %404 = vmatprep.subr.mxu0 0.0
        %405 = vmatpush2.msra.mxu0 %v330
        %406 = vmatprep.subr.mxu0 0.0
        %407 = vmatpush2.msra.mxu0 %v329
        %408 = vmatprep.subr.mxu0 0.0
        %409 = vmatpush2.msra.mxu0 %v328
        %410 = vmatprep.subr.mxu0 0.0
        %411 = vmatpush2.msra.mxu0 %v327
        %412 = vmatprep.subr.mxu0 0.0
        %413 = vmatpush2.msra.mxu0 %v326
        %414 = vmatprep.subr.mxu0 0.0
        %415 = vmatpush2.msra.mxu0 %v325
        %416 = vmatprep.subr.mxu0 0.0
        %417 = vmatpush2.msra.mxu0 %v324
        %418 = vmatprep.subr.mxu0 0.0
        %419 = vmatpush2.msra.mxu0 %v323
        %420 = vmatprep.subr.mxu0 0.0
        %421 = vmatpush2.msra.mxu0 %v322
        %422 = vmatprep.subr.mxu0 0.0
        %423 = vmatpush2.msra.mxu0 %v321
        %424 = vmatprep.subr.mxu0 0.0
        %425 = vmatpush2.msra.mxu0 %v320
        %426 = vmatprep.subr.mxu0 0.0
        %427 = vmatpush2.msra.mxu0 %v319
        %428 = vmatprep.subr.mxu0 0.0
        %429 = vmatpush2.msra.mxu0 %v318
        %430 = vmatprep.mubr.f32.mxu0 %v299
        %431 = vmatmul.mubr.f32.gmra.mxu0 %v298
        %v432 = vpop.f32.mrf.mxu0
        %v433 = vadd.f32 0.0, %v432
        %v434 = vpop.f32.mrf.mxu0
        %435 = vdwg.mxu0
        %436 = vmatprep.subr.mxu0 0.0
        %437 = vmatpush1.msra.mxu0 %v349
        %438 = vmatprep.subr.mxu0 0.0
        %439 = vmatpush1.msra.mxu0 %v348
        %440 = vmatprep.subr.mxu0 0.0
        %441 = vmatpush1.msra.mxu0 %v347
        %442 = vmatprep.subr.mxu0 0.0
        %443 = vmatpush1.msra.mxu0 %v346
        %444 = vmatprep.subr.mxu0 0.0
        %445 = vmatpush1.msra.mxu0 %v345
        %446 = vmatprep.subr.mxu0 0.0
        %447 = vmatpush1.msra.mxu0 %v344
        %448 = vmatprep.subr.mxu0 0.0
        %449 = vmatpush1.msra.mxu0 %v343
        %450 = vmatprep.subr.mxu0 0.0
        %451 = vmatpush1.msra.mxu0 %v342
        %452 = vmatprep.subr.mxu0 0.0
        %453 = vmatpush1.msra.mxu0 %v341
        %454 = vmatprep.subr.mxu0 0.0
        %455 = vmatpush1.msra.mxu0 %v340
        %456 = vmatprep.subr.mxu0 0.0
        %457 = vmatpush1.msra.mxu0 %v339
        %458 = vmatprep.subr.mxu0 0.0
        %459 = vmatpush1.msra.mxu0 %v338
        %460 = vmatprep.subr.mxu0 0.0
        %461 = vmatpush1.msra.mxu0 %v337
        %462 = vmatprep.subr.mxu0 0.0
        %463 = vmatpush1.msra.mxu0 %v336
        %464 = vmatprep.subr.mxu0 0.0
        %465 = vmatpush1.msra.mxu0 %v335
        %466 = vmatprep.subr.mxu0 0.0
        %467 = vmatpush1.msra.mxu0 %v334
        %468 = vmatprep.subr.mxu0 0.0
        %469 = vmatpush2.msra.mxu0 %v365
        %470 = vmatprep.subr.mxu0 0.0
        %471 = vmatpush2.msra.mxu0 %v364
        %472 = vmatprep.subr.mxu0 0.0
        %473 = vmatpush2.msra.mxu0 %v363
        %474 = vmatprep.subr.mxu0 0.0
        %475 = vmatpush2.msra.mxu0 %v362
        %476 = vmatprep.subr.mxu0 0.0
        %477 = vmatpush2.msra.mxu0 %v361
        %478 = vmatprep.subr.mxu0 0.0
        %479 = vmatpush2.msra.mxu0 %v360
        %480 = vmatprep.subr.mxu0 0.0
        %481 = vmatpush2.msra.mxu0 %v359
        %482 = vmatprep.subr.mxu0 0.0
        %483 = vmatpush2.msra.mxu0 %v358
        %484 = vmatprep.subr.mxu0 0.0
        %485 = vmatpush2.msra.mxu0 %v357
        %486 = vmatprep.subr.mxu0 0.0
        %487 = vmatpush2.msra.mxu0 %v356
        %488 = vmatprep.subr.mxu0 0.0
        %489 = vmatpush2.msra.mxu0 %v355
        %490 = vmatprep.subr.mxu0 0.0
        %491 = vmatpush2.msra.mxu0 %v354
        %492 = vmatprep.subr.mxu0 0.0
        %493 = vmatpush2.msra.mxu0 %v353
        %494 = vmatprep.subr.mxu0 0.0
        %495 = vmatpush2.msra.mxu0 %v352
        %496 = vmatprep.subr.mxu0 0.0
        %497 = vmatpush2.msra.mxu0 %v351
        %498 = vmatprep.subr.mxu0 0.0
        %499 = vmatpush2.msra.mxu0 %v350
        %500 = vmatprep.mubr.f32.mxu0 %v301
        %501 = vmatmul.mubr.f32.gmra.mxu0 %v300
        %v502 = vpop.f32.mrf.mxu0
        %v503 = vadd.f32 %v433, %v502
        %v504 = vpop.f32.mrf.mxu0
        %505 = vdwg.mxu0
        %v506 = vadd.f32 %v297, %v503
        %507 = vst [vmem:[#allocation2] sm:$0xff] %v506
        %p508 = scmp.eq.s32.totalorder %s25, 1
        // Predicated region
        $region49: #{two_mlp_head.1} parent=39 // pred_check
          %p509 = pneg %p508
        $region50: #{two_mlp_head.1} parent=39 // pred_check_branch
          %511 = sbr.rel (%p509) target = $region52
        $region51: #{two_mlp_head.1} parent=39 // pred_region
          %v512 = vld [vmem:[#allocation2] sm:$0xff]
          %v513 = vmax.f32 %v512, 0.0
          %v514 = vld [vmem:[%s3] sm:$0xff]
          %v515 = vld [vmem:[%s3 + $0x8] sm:$0xff]
          %v516 = vld [vmem:[%s3 + $0x10] sm:$0xff]
          %v517 = vld [vmem:[%s3 + $0x18] sm:$0xff]
          %v518 = vld [vmem:[%s3 + $0x20] sm:$0xff]
          %v519 = vld [vmem:[%s3 + $0x28] sm:$0xff]
          %v520 = vld [vmem:[%s3 + $0x30] sm:$0xff]
          %v521 = vld [vmem:[%s3 + $0x38] sm:$0xff]
          %v522 = vld [vmem:[%s3 + $0x40] sm:$0xff]
          %v523 = vld [vmem:[%s3 + $0x48] sm:$0xff]
          %v524 = vld [vmem:[%s3 + $0x50] sm:$0xff]
          %v525 = vld [vmem:[%s3 + $0x58] sm:$0xff]
          %v526 = vld [vmem:[%s3 + $0x60] sm:$0xff]
          %v527 = vld [vmem:[%s3 + $0x68] sm:$0xff]
          %v528 = vld [vmem:[%s3 + $0x70] sm:$0xff]
          %v529 = vld [vmem:[%s3 + $0x78] sm:$0xff]
          %v530 = vld [vmem:[%s4] sm:$0x1]
          %v532 = vlaneseq
          %v533 = vshrl.u32 %v532, 7
          %v534 = vsub.s32 0, %v533
          %v535 = vrot.slane %v530, %v534
          %537 = vmatprep.subr.mxu0 0.0
          %538 = vmatpush1.msra.mxu0 %v529
          %539 = vmatprep.subr.mxu0 0.0
          %540 = vmatpush1.msra.mxu0 %v528
          %541 = vmatprep.subr.mxu0 0.0
          %542 = vmatpush1.msra.mxu0 %v527
          %543 = vmatprep.subr.mxu0 0.0
          %544 = vmatpush1.msra.mxu0 %v526
          %545 = vmatprep.subr.mxu0 0.0
          %546 = vmatpush1.msra.mxu0 %v525
          %547 = vmatprep.subr.mxu0 0.0
          %548 = vmatpush1.msra.mxu0 %v524
          %549 = vmatprep.subr.mxu0 0.0
          %550 = vmatpush1.msra.mxu0 %v523
          %551 = vmatprep.subr.mxu0 0.0
          %552 = vmatpush1.msra.mxu0 %v522
          %553 = vmatprep.subr.mxu0 0.0
          %554 = vmatpush1.msra.mxu0 %v521
          %555 = vmatprep.subr.mxu0 0.0
          %556 = vmatpush1.msra.mxu0 %v520
          %557 = vmatprep.subr.mxu0 0.0
          %558 = vmatpush1.msra.mxu0 %v519
          %559 = vmatprep.subr.mxu0 0.0
          %560 = vmatpush1.msra.mxu0 %v518
          %561 = vmatprep.subr.mxu0 0.0
          %562 = vmatpush1.msra.mxu0 %v517
          %563 = vmatprep.subr.mxu0 0.0
          %564 = vmatpush1.msra.mxu0 %v516
          %565 = vmatprep.subr.mxu0 0.0
          %566 = vmatpush1.msra.mxu0 %v515
          %567 = vmatprep.subr.mxu0 0.0
          %568 = vmatpush1.msra.mxu0 %v514
          %569 = vmatprep.subr.mxu0 0.0
          %570 = vmatpush2.msra.mxu0 0.0
          %571 = vmatprep.subr.mxu0 0.0
          %572 = vmatpush2.msra.mxu0 0.0
          %573 = vmatprep.subr.mxu0 0.0
          %574 = vmatpush2.msra.mxu0 0.0
          %575 = vmatprep.subr.mxu0 0.0
          %576 = vmatpush2.msra.mxu0 0.0
          %577 = vmatprep.subr.mxu0 0.0
          %578 = vmatpush2.msra.mxu0 0.0
          %579 = vmatprep.subr.mxu0 0.0
          %580 = vmatpush2.msra.mxu0 0.0
          %581 = vmatprep.subr.mxu0 0.0
          %582 = vmatpush2.msra.mxu0 0.0
          %583 = vmatprep.subr.mxu0 0.0
          %584 = vmatpush2.msra.mxu0 0.0
          %585 = vmatprep.subr.mxu0 0.0
          %586 = vmatpush2.msra.mxu0 0.0
          %587 = vmatprep.subr.mxu0 0.0
          %588 = vmatpush2.msra.mxu0 0.0
          %589 = vmatprep.subr.mxu0 0.0
          %590 = vmatpush2.msra.mxu0 0.0
          %591 = vmatprep.subr.mxu0 0.0
          %592 = vmatpush2.msra.mxu0 0.0
          %593 = vmatprep.subr.mxu0 0.0
          %594 = vmatpush2.msra.mxu0 0.0
          %595 = vmatprep.subr.mxu0 0.0
          %596 = vmatpush2.msra.mxu0 0.0
          %597 = vmatprep.subr.mxu0 0.0
          %598 = vmatpush2.msra.mxu0 0.0
          %599 = vmatprep.subr.mxu0 0.0
          %600 = vmatpush2.msra.mxu0 0.0
          %601 = vmatprep.mubr.f32.mxu0 0.0
          %602 = vmatmul.mubr.f32.gmra.mxu0 %v513
          %v603 = vpop.f32.mrf.mxu0
          %v604 = vadd.f32 %v535, %v603
          %v605 = vpop.f32.mrf.mxu0
          %606 = vdwg.mxu0
          %v607 = vmax.f32 %v604, 0.0
          %608 = vst [vmem:[#allocation6] sm:$0xff] %v607
        $region52: #{two_mlp_head.1} parent=39 // pred_fallthru
          _
        // Predicated region
        $region53: #{two_mlp_head.1} parent=39 // pred_check
          %p609 = pneg %p167
        $region54: #{two_mlp_head.1} parent=39 // pred_check_branch
          %611 = sbr.rel (%p609) target = $region56
        $region55: #{two_mlp_head.1} parent=39 // pred_region
          %s613 = ssub.s32 128, 128
          %614 = vsyncadd [#allocation5], %s613
          %s615 = smul.addr %s24, 128
          %s616 = scalar_lea.hbm %s5, %s615
          %s618 = sshll.u32 [#allocation6], 4
          %s619 = int_to_ptr.vmem [resolvable:$true] %s618
          %621 = dma.vmem_to_hbm [thread:$0]  %s619, 128, %s616, [#allocation5]
        $region56: #{two_mlp_head.1} parent=39 // pred_fallthru
          _
        // Predicated region
        $region57: #{two_mlp_head.1} parent=39 // pred_check
          %p622 = pneg %p167
        $region58: #{two_mlp_head.1} parent=39 // pred_check_branch
          %624 = sbr.rel (%p622) target = $region60
        $region59: #{two_mlp_head.1} parent=39 // pred_region
          %625 = dma.done [#allocation5], 128
        $region60: #{two_mlp_head.1} parent=39 // pred_fallthru
          _
      $region40: #{two_mlp_head.1} parent=5 // pred_fallthru
        _
      %p626 = scmp.le.s32.totalorder 2, %s15
      // Predicated region
      $region61: #{two_mlp_head.1} parent=5 // pred_check
        %p627 = pneg %p626
      $region62: #{two_mlp_head.1} parent=5 // pred_check_branch
        %629 = sbr.rel (%p627) target = $region64
      $region63: #{two_mlp_head.1} parent=5 // pred_region
        %s630 = ssub.s32 %s15, 2
      $region64: #{two_mlp_head.1} parent=5 // pred_fallthru
        _
    $region6: #{two_mlp_head.1} parent=1 // loop_footer
      %s19 = sadd.s32 1, %s15
    $region7: #{two_mlp_head.1} parent=1 // loop_footer_branch
      %14 = sbr.rel target = $region3
    $region8: #{two_mlp_head.1} parent=1 // loop_exit
      _
    %631 = vsyncpa [#allocation4], 1
    %s632 = scalar_lea.sflag [#allocation4], 1
    %633 = vsyncpa %s632, 1
    %634 = vsyncpa [#allocation5], 1
    %s635 = scalar_lea.sflag [#allocation5], 1
    %636 = vsyncpa %s635, 1

</llo_original>
